<compile_context>
chip_gen: v6e
topology: v6e:2x2x1
jax: 0.10.0
libtpu: 0.0.40
codegen_flags: <defaults>
</compile_context>

<pallas_src>
import jax
import jax.numpy as jnp
from jax.experimental import pallas as pl
from jax.experimental.pallas import tpu as pltpu


# ----------------------------------------------------------------------------
# Tiling helper: pick (row_tile, lane_tile) by bytes, not by a fixed lane count
# ----------------------------------------------------------------------------
def _pick_tiles(R, N, elem_bytes, block_bytes=2 * 1024 * 1024):
    """Largest lane-dense block of ~block_bytes.

    lane tile: multiple of 128 (or the full N when N < 128), grown up to the
    whole row when the byte budget allows; row tile: multiple of 8 (or the
    full R).  Ragged remainders are handled by cdiv grids + masking, so no
    exact-divisor search is needed.  block_bytes ~2 MiB keeps the
    double-buffered in+out working set well under every generation's scoped
    VMEM default (v5e 16 MiB / v6e 32 MiB / v7x 32 MiB) while sitting on the
    measured HBM-roofline plateau.
    """
    if N <= 128:
        tl = N                                    # full (possibly ragged) lane extent
    else:
        min_tr = 8 if R >= 8 else R
        lane_cap = max(128, (block_bytes // (min_tr * elem_bytes)) // 128 * 128)
        tl = min(lane_cap, (N // 128) * 128)
    tr_cap = max(8, (block_bytes // (tl * elem_bytes)) // 8 * 8)
    tr = R if R <= tr_cap else tr_cap
    return tr, tl


# ----------------------------------------------------------------------------
# Apply kernel: out = x * scale + bias   (memory-bound stream)
# ----------------------------------------------------------------------------
def _apply_kernel(x_ref, scale_ref, bias_ref, out_ref):
    x = x_ref[...].astype(jnp.float32)            # cast in-register (VPU), not in HBM
    y = x * scale_ref[...] + bias_ref[...]
    out_ref[...] = y.astype(out_ref.dtype)


def actnorm_apply(x2d, scale_row, bias_row):
    """x2d: (R, N) native dtype; scale_row/bias_row: (R, 1) f32 -> (R, N) x2d.dtype."""
    R, N = x2d.shape
    eb = x2d.dtype.itemsize
    tr, tl = _pick_tiles(R, N, eb)
    grid = (pl.cdiv(R, tr), pl.cdiv(N, tl))
    return pl.pallas_call(
        _apply_kernel,
        out_shape=jax.ShapeDtypeStruct((R, N), x2d.dtype),
        grid=grid,
        in_specs=[
            pl.BlockSpec((tr, tl), lambda ri, ki: (ri, ki)),
            pl.BlockSpec((tr, 1), lambda ri, ki: (ri, 0)),   # params tiled with rows
            pl.BlockSpec((tr, 1), lambda ri, ki: (ri, 0)),
        ],
        out_specs=pl.BlockSpec((tr, tl), lambda ri, ki: (ri, ki)),
        compiler_params=pltpu.CompilerParams(
            dimension_semantics=("parallel", "parallel")),   # both axes independent
        cost_estimate=pl.CostEstimate(
            flops=2 * R * N, transcendentals=0,
            bytes_accessed=2 * R * N * eb + 2 * R * 4),
    )(x2d, scale_row, bias_row)


# ----------------------------------------------------------------------------
# Stats kernel (init path only): per-row shifted sum / sum-of-squares
# ----------------------------------------------------------------------------
def actnorm_stats(x2d):
    """x2d: (R, N) native dtype -> (pivot, sum(x-pivot), sum((x-pivot)^2)), each (R, 1) f32."""
    R, N = x2d.shape
    eb = x2d.dtype.itemsize
    tr, tl = _pick_tiles(R, N, eb)
    nk = pl.cdiv(N, tl)
    grid = (pl.cdiv(R, tr), nk)

    nchunks = tl // 128
    fold = (tl % 128 == 0) and (1 <= nchunks <= 32)   # lane-dense VPU fold path
    needs_mask = (N % tl != 0)                        # ragged last lane block

    def stats_kernel(x_ref, pivot_ref, sum_ref, sumsq_ref, pivot_sc, acc_s, acc_q):
        ki = pl.program_id(1)
        x = x_ref[...].astype(jnp.float32)
        if needs_mask:
            lane = jax.lax.broadcasted_iota(jnp.int32, (tr, tl), 1)
            valid = (ki * tl + lane) < N
            x = jnp.where(valid, x, 0.0)

        @pl.when(ki == 0)
        def _():
            # Per-row pivot = mean of the first lane block (block 0 is always
            # fully in-bounds since tl <= N).  Shifting by ~the mean keeps the
            # one-pass variance numerically sound in f32.
            pivot_sc[...] = jnp.sum(x, axis=1, keepdims=True) * (1.0 / tl)
            acc_s[...] = jnp.zeros_like(acc_s)
            acc_q[...] = jnp.zeros_like(acc_q)

        xs = x - pivot_sc[...]
        if needs_mask:
            xs = jnp.where(valid, xs, 0.0)

        if fold:
            # Fold 128-lane chunks with pure VPU adds; the expensive XLU
            # cross-lane reduce happens once per row block at finalize.
            s_new = xs[:, 0:128]
            q_new = s_new * s_new
            for c in range(1, nchunks):
                chunk = xs[:, c * 128:(c + 1) * 128]
                s_new = s_new + chunk
                q_new = q_new + chunk * chunk
            acc_s[...] += s_new
            acc_q[...] += q_new
        else:
            # Tiny-N or very-wide-tile fallback: direct per-step reduce.
            acc_s[:, 0:1] = acc_s[:, 0:1] + jnp.sum(xs, axis=1, keepdims=True)
            acc_q[:, 0:1] = acc_q[:, 0:1] + jnp.sum(xs * xs, axis=1, keepdims=True)

        @pl.when(ki == pl.num_programs(1) - 1)
        def _():
            pivot_ref[...] = pivot_sc[...]
            sum_ref[...] = jnp.sum(acc_s[...], axis=1, keepdims=True)
            sumsq_ref[...] = jnp.sum(acc_q[...], axis=1, keepdims=True)

    out_shapes = (
        jax.ShapeDtypeStruct((R, 1), jnp.float32),   # pivot
        jax.ShapeDtypeStruct((R, 1), jnp.float32),   # sum(x - pivot)
        jax.ShapeDtypeStruct((R, 1), jnp.float32),   # sum((x - pivot)^2)
    )
    return pl.pallas_call(
        stats_kernel,
        out_shape=out_shapes,
        grid=grid,
        in_specs=[pl.BlockSpec((tr, tl), lambda ri, ki: (ri, ki))],
        out_specs=(
            pl.BlockSpec((tr, 1), lambda ri, ki: (ri, 0)),   # resident per row block
            pl.BlockSpec((tr, 1), lambda ri, ki: (ri, 0)),
            pl.BlockSpec((tr, 1), lambda ri, ki: (ri, 0)),
        ),
        scratch_shapes=[
            pltpu.VMEM((tr, 1), jnp.float32),     # pivot
            pltpu.VMEM((tr, 128), jnp.float32),   # lane-dense sum accumulator
            pltpu.VMEM((tr, 128), jnp.float32),   # lane-dense sumsq accumulator
        ],
        compiler_params=pltpu.CompilerParams(
            dimension_semantics=("parallel", "arbitrary")),  # rows sharded (v7x), lanes reduced
        cost_estimate=pl.CostEstimate(
            flops=4 * R * N, transcendentals=0,
            bytes_accessed=R * N * eb + 3 * R * 4),
    )(x2d)


# ----------------------------------------------------------------------------
# Module-like wrapper (mirrors the PyTorch ActNorm state machine)
# ----------------------------------------------------------------------------
class ActNormPallas:
    def __init__(self, channel, logscale_factor=1.0, scale=1.0):
        # Host-side flag, matching the PyTorch module; the data-dependent init
        # path is therefore not capturable inside a single jax.jit (same as
        # the original nn.Module with in-place .data.copy_()).
        self.initialized = False
        self.logscale_factor = float(logscale_factor)
        self.scale = float(scale)
        self.channel = channel
        self.bias = jnp.zeros((1, channel, 1), jnp.float32)
        self.logs = jnp.zeros((1, channel, 1), jnp.float32)

    def forward(self, x):
        B, C, H, W = x.shape
        x2d = x.reshape(B * C, H * W)           # free, contiguous view; native dtype

        if not self.initialized:
            self.initialized = True
            n_row = float(H * W)
            n_tot = float(B * H * W)
            pivot, s, q = actnorm_stats(x2d)                     # (B*C, 1) f32 each
            pivot = pivot.reshape(B, C)
            s = s.reshape(B, C)
            q = q.reshape(B, C)
            # Per-row mean and centered sum-of-squares from shifted sums.
            m_row = pivot + s / n_row                            # (B, C)
            m2_row = jnp.maximum(q - (s * s) / n_row, 0.0)       # (B, C)
            # Chan-style combination of equal-count rows -> per-channel stats.
            mean_c = jnp.mean(m_row, axis=0)                     # (C,)
            m2_c = (jnp.sum(m2_row, axis=0)
                    + n_row * jnp.sum((m_row - mean_c[None, :]) ** 2, axis=0))
            var_c = m2_c / n_tot                                 # (C,)
            b = -mean_c
            logs = jnp.log(self.scale / (jnp.sqrt(var_c) + 1e-6)) / self.logscale_factor
            self.bias = b.reshape(1, C, 1)
            self.logs = logs.reshape(1, C, 1)

        # Tiny (C,)-sized parameter math stays in the wrapper: keeps the apply
        # kernel a single lane-dense FMA with no lane-narrow stores.
        logs_c = self.logs.reshape(C)
        bias_c = self.bias.reshape(C)
        scale_row = jnp.broadcast_to(jnp.exp(logs_c)[None, :], (B, C)).reshape(B * C, 1)
        bias_row = jnp.broadcast_to(bias_c[None, :], (B, C)).reshape(B * C, 1)

        y2d = actnorm_apply(x2d, scale_row, bias_row)
        y = y2d.reshape(B, C, H, W)
        dlogdet = jnp.sum(logs_c) * (H * W)
        return y, dlogdet

    # TODO(synk): reverse() not required for the forward-pass spec; it would be
    # the same apply kernel with scale=exp(-logs), bias'=-bias*exp(-logs).


# ----------------------------------------------------------------------------
# Pure-JAX reference (first-call semantics of the PyTorch module)
# ----------------------------------------------------------------------------
def actnorm_ref_first_call(x, scale=1.0, logscale_factor=1.0):
    B, C, H, W = x.shape
    xf = x.reshape(B, C, H * W).astype(jnp.float32)
    n = B * H * W
    b = -jnp.sum(xf, axis=(0, 2)) / n                            # (C,)
    var = jnp.sum((xf + b[None, :, None]) ** 2, axis=(0, 2)) / n
    logs = jnp.log(scale / (jnp.sqrt(var) + 1e-6)) / logscale_factor
    out = xf * jnp.exp(logs)[None, :, None] + b[None, :, None]
    dlogdet = jnp.sum(logs) * H * W
    return out.reshape(B, C, H, W), dlogdet


if __name__ == "__main__":
    key = jax.random.PRNGKey(0)
    B, C, H, W = 2, 4, 16, 16
    # Offset mean well away from zero to exercise the numerically-stable
    # (shifted) variance path.
    x = jax.random.normal(key, (B, C, H, W), dtype=jnp.float32) * 1.7 + 0.3

    actnorm = ActNormPallas(channel=C, logscale_factor=1.0, scale=1.0)

    # first call: data-dependent init (stats kernel) + affine (apply kernel)
    y, dlogdet = actnorm.forward(x)
    y = jax.block_until_ready(y)
    dlogdet = jax.block_until_ready(dlogdet)

    y_ref, dlogdet_ref = actnorm_ref_first_call(x)
    assert jnp.allclose(y, y_ref, rtol=1e-4, atol=1e-4), "init-path output mismatch"
    assert jnp.allclose(dlogdet, dlogdet_ref, rtol=1e-4, atol=1e-4), "init-path dlogdet mismatch"

    # second call: initialized path (apply kernel only)
    y2, dlogdet2 = actnorm.forward(x)
    y2 = jax.block_until_ready(y2)
    assert jnp.allclose(y2, y_ref, rtol=1e-4, atol=1e-4), "apply-path output mismatch"
    assert jnp.allclose(dlogdet2, dlogdet_ref, rtol=1e-4, atol=1e-4), "apply-path dlogdet mismatch"

    print("KERNEL_OK")
</pallas_src>

<mosaic_0001>
module attributes {stable_mosaic.version = 11 : i64} {
  func.func @stats_kernel(%arg0: i32, %arg1: i32, %arg2: memref<8x256xf32, #tpu.memory_space<vmem>>, %arg3: memref<8x1xf32, #tpu.memory_space<vmem>>, %arg4: memref<8x1xf32, #tpu.memory_space<vmem>>, %arg5: memref<8x1xf32, #tpu.memory_space<vmem>>, %arg6: memref<8x1xf32, #tpu.memory_space<vmem>>, %arg7: memref<8x128xf32, #tpu.memory_space<vmem>>, %arg8: memref<8x128xf32, #tpu.memory_space<vmem>>) attributes {dimension_semantics = [#tpu.dimension_semantics<parallel>, #tpu.dimension_semantics<arbitrary>], iteration_bounds = array<i64: 1, 1>, scalar_prefetch = 0 : i64, scratch_operands = 3 : i64, tpu.core_type = #tpu.core_type<tc>, window_params = [{transform_indices = @transform_0, window_bounds = array<i64: 8, 256>}, {transform_indices = @transform_1, window_bounds = array<i64: 8, 1>}, {transform_indices = @transform_2, window_bounds = array<i64: 8, 1>}, {transform_indices = @transform_3, window_bounds = array<i64: 8, 1>}]} {
    %c0 = arith.constant 0 : index
    %c0_0 = arith.constant 0 : index
    %0 = vector.load %arg2[%c0, %c0_0] : memref<8x256xf32, #tpu.memory_space<vmem>>, vector<8x256xf32>
    %c0_i32 = arith.constant 0 : i32
    %1 = arith.cmpi eq, %arg1, %c0_i32 : i32
    %2 = arith.extui %1 : i1 to i32
    %c0_i32_1 = arith.constant 0 : i32
    %3 = arith.cmpi ne, %2, %c0_i32_1 : i32
    scf.if %3 {
      %cst = arith.constant dense<0.000000e+00> : vector<8xf32>
      %22 = vector.multi_reduction <add>, %0, %cst [1] : vector<8x256xf32> to vector<8xf32>
      %23 = vector.shape_cast %22 : vector<8xf32> to vector<8x1xf32>
      %cst_14 = arith.constant 3.906250e-03 : f32
      %24 = vector.broadcast %cst_14 : f32 to vector<8x1xf32>
      %25 = arith.mulf %23, %24 : vector<8x1xf32>
      %c0_15 = arith.constant 0 : index
      %c0_16 = arith.constant 0 : index
      %26 = vector.load %arg6[%c0_15, %c0_16] : memref<8x1xf32, #tpu.memory_space<vmem>>, vector<8x1xf32>
      tpu.vector_store %arg6[%c0_15, %c0_16], %25 {strides = array<i32>} : memref<8x1xf32, #tpu.memory_space<vmem>>, vector<8x1xf32>,
      %cst_17 = arith.constant 0.000000e+00 : f32
      %27 = vector.broadcast %cst_17 : f32 to vector<8x128xf32>
      %c0_18 = arith.constant 0 : index
      %c0_19 = arith.constant 0 : index
      %28 = vector.load %arg7[%c0_18, %c0_19] : memref<8x128xf32, #tpu.memory_space<vmem>>, vector<8x128xf32>
      tpu.vector_store %arg7[%c0_18, %c0_19], %27 {strides = array<i32>} : memref<8x128xf32, #tpu.memory_space<vmem>>, vector<8x128xf32>,
      %cst_20 = arith.constant 0.000000e+00 : f32
      %29 = vector.broadcast %cst_20 : f32 to vector<8x128xf32>
      %c0_21 = arith.constant 0 : index
      %c0_22 = arith.constant 0 : index
      %30 = vector.load %arg8[%c0_21, %c0_22] : memref<8x128xf32, #tpu.memory_space<vmem>>, vector<8x128xf32>
      tpu.vector_store %arg8[%c0_21, %c0_22], %29 {strides = array<i32>} : memref<8x128xf32, #tpu.memory_space<vmem>>, vector<8x128xf32>,
    } else {
    }
    %c0_2 = arith.constant 0 : index
    %c0_3 = arith.constant 0 : index
    %4 = vector.load %arg6[%c0_2, %c0_3] : memref<8x1xf32, #tpu.memory_space<vmem>>, vector<8x1xf32>
    %5 = vector.broadcast %4 : vector<8x1xf32> to vector<8x256xf32>
    %6 = arith.subf %0, %5 : vector<8x256xf32>
    %7 = vector.extract_strided_slice %6 {offsets = [0, 0], sizes = [8, 128], strides = [1, 1]} : vector<8x256xf32> to vector<8x128xf32>
    %8 = arith.mulf %7, %7 : vector<8x128xf32>
    %9 = vector.extract_strided_slice %6 {offsets = [0, 128], sizes = [8, 128], strides = [1, 1]} : vector<8x256xf32> to vector<8x128xf32>
    %10 = arith.addf %7, %9 : vector<8x128xf32>
    %11 = arith.mulf %9, %9 : vector<8x128xf32>
    %12 = arith.addf %8, %11 : vector<8x128xf32>
    %c0_4 = arith.constant 0 : index
    %c0_5 = arith.constant 0 : index
    %13 = vector.load %arg7[%c0_4, %c0_5] : memref<8x128xf32, #tpu.memory_space<vmem>>, vector<8x128xf32>
    %14 = arith.addf %13, %10 : vector<8x128xf32>
    %c0_6 = arith.constant 0 : index
    %c0_7 = arith.constant 0 : index
    %15 = vector.load %arg7[%c0_6, %c0_7] : memref<8x128xf32, #tpu.memory_space<vmem>>, vector<8x128xf32>
    tpu.vector_store %arg7[%c0_6, %c0_7], %14 {strides = array<i32>} : memref<8x128xf32, #tpu.memory_space<vmem>>, vector<8x128xf32>,
    %c0_8 = arith.constant 0 : index
    %c0_9 = arith.constant 0 : index
    %16 = vector.load %arg8[%c0_8, %c0_9] : memref<8x128xf32, #tpu.memory_space<vmem>>, vector<8x128xf32>
    %17 = arith.addf %16, %12 : vector<8x128xf32>
    %c0_10 = arith.constant 0 : index
    %c0_11 = arith.constant 0 : index
    %18 = vector.load %arg8[%c0_10, %c0_11] : memref<8x128xf32, #tpu.memory_space<vmem>>, vector<8x128xf32>
    tpu.vector_store %arg8[%c0_10, %c0_11], %17 {strides = array<i32>} : memref<8x128xf32, #tpu.memory_space<vmem>>, vector<8x128xf32>,
    %c0_i32_12 = arith.constant 0 : i32
    %19 = arith.cmpi eq, %arg1, %c0_i32_12 : i32
    %20 = arith.extui %19 : i1 to i32
    %c0_i32_13 = arith.constant 0 : i32
    %21 = arith.cmpi ne, %20, %c0_i32_13 : i32
    scf.if %21 {
      %c0_14 = arith.constant 0 : index
      %c0_15 = arith.constant 0 : index
      %22 = vector.load %arg6[%c0_14, %c0_15] : memref<8x1xf32, #tpu.memory_space<vmem>>, vector<8x1xf32>
      %c0_16 = arith.constant 0 : index
      %c0_17 = arith.constant 0 : index
      %23 = vector.load %arg3[%c0_16, %c0_17] : memref<8x1xf32, #tpu.memory_space<vmem>>, vector<8x1xf32>
      tpu.vector_store %arg3[%c0_16, %c0_17], %22 {strides = array<i32>} : memref<8x1xf32, #tpu.memory_space<vmem>>, vector<8x1xf32>,
      %c0_18 = arith.constant 0 : index
      %c0_19 = arith.constant 0 : index
      %24 = vector.load %arg7[%c0_18, %c0_19] : memref<8x128xf32, #tpu.memory_space<vmem>>, vector<8x128xf32>
      %cst = arith.constant dense<0.000000e+00> : vector<8xf32>
      %25 = vector.multi_reduction <add>, %24, %cst [1] : vector<8x128xf32> to vector<8xf32>
      %26 = vector.shape_cast %25 : vector<8xf32> to vector<8x1xf32>
      %c0_20 = arith.constant 0 : index
      %c0_21 = arith.constant 0 : index
      %27 = vector.load %arg4[%c0_20, %c0_21] : memref<8x1xf32, #tpu.memory_space<vmem>>, vector<8x1xf32>
      tpu.vector_store %arg4[%c0_20, %c0_21], %26 {strides = array<i32>} : memref<8x1xf32, #tpu.memory_space<vmem>>, vector<8x1xf32>,
      %c0_22 = arith.constant 0 : index
      %c0_23 = arith.constant 0 : index
      %28 = vector.load %arg8[%c0_22, %c0_23] : memref<8x128xf32, #tpu.memory_space<vmem>>, vector<8x128xf32>
      %cst_24 = arith.constant dense<0.000000e+00> : vector<8xf32>
      %29 = vector.multi_reduction <add>, %28, %cst_24 [1] : vector<8x128xf32> to vector<8xf32>
      %30 = vector.shape_cast %29 : vector<8xf32> to vector<8x1xf32>
      %c0_25 = arith.constant 0 : index
      %c0_26 = arith.constant 0 : index
      %31 = vector.load %arg5[%c0_25, %c0_26] : memref<8x1xf32, #tpu.memory_space<vmem>>, vector<8x1xf32>
      tpu.vector_store %arg5[%c0_25, %c0_26], %30 {strides = array<i32>} : memref<8x1xf32, #tpu.memory_space<vmem>>, vector<8x1xf32>,
    } else {
    }
    return
  }
  func.func @transform_0(%arg0: i32, %arg1: i32) -> (i32, i32) {
    %c0_i32 = arith.constant 0 : i32
    return %arg0, %arg1 : i32, i32
  }
  func.func @transform_1(%arg0: i32, %arg1: i32) -> (i32, i32) {
    %c0_i32 = arith.constant 0 : i32
    %c0_i32_0 = arith.constant 0 : i32
    return %arg0, %c0_i32 : i32, i32
  }
  func.func @transform_2(%arg0: i32, %arg1: i32) -> (i32, i32) {
    %c0_i32 = arith.constant 0 : i32
    %c0_i32_0 = arith.constant 0 : i32
    return %arg0, %c0_i32 : i32, i32
  }
  func.func @transform_3(%arg0: i32, %arg1: i32) -> (i32, i32) {
    %c0_i32 = arith.constant 0 : i32
    %c0_i32_0 = arith.constant 0 : i32
    return %arg0, %c0_i32 : i32, i32
  }
}

</mosaic_0001>

<llo_original>
// kernel: tpu_custom_call.1
$region0: #{tpu_custom_call.1}
  #allocation0 [shape = 'u32[]', space=smem, size = 0x4, offset = 0x4, fixed_abs, tag = 'smem constant byte address 0x4 - core index']
  #allocation1 [shape = 'u32[144,128]{1,0:T(1,128)}', space=vmem, size = 0x12000, scoped, tag = 'internal scratch']
  #allocation2 [shape = 'f32[8,1]{1,0:T(8,128)}', space=vmem, size = 0x1000, scoped, tag = 'scratch operand']
  #allocation3 [shape = 'f32[8,128]{1,0:T(8,128)}', space=vmem, size = 0x1000, scoped, tag = 'scratch operand']
  #allocation4 [shape = 'f32[8,128]{1,0:T(8,128)}', space=vmem, size = 0x1000, scoped, tag = 'scratch operand']
  %s0 = inlined_call_operand.hbm [shape: f32[8,256], index: 0, kind: input, shape index: {}]
  %s1 = inlined_call_operand.vmem [shape: f32[8,1], index: 1, kind: output, shape index: {0}]
  %s2 = inlined_call_operand.vmem [shape: f32[8,1], index: 2, kind: output, shape index: {1}]
  %s3 = inlined_call_operand.vmem [shape: f32[8,1], index: 3, kind: output, shape index: {2}]
  %4 = xla_tuple %s1, %s2, %s3
  %s5 = sld [smem:[#allocation0]]
  $region42: #{tpu_custom_call.1} parent=0
    _
  %s7 = ssub.s32 1, %s5
  %s8 = scalar_select 0, %s7, %s5
  $region1: #{tpu_custom_call.1} parent=0
    #allocation5 [shape = 'u8[8192]{0}', space=vmem, size = 0x2000, scoped, tag = 'input window, operand 0, single buffered']
    #allocation6 [shape = 's32[1]{0}', space=sflag, size = 0x4, scoped, tag = 'scoped memory for tpu_custom_call.1']
    %9 = vsyncpa [#allocation6], 0
    // Predicated region
    $region2: #{tpu_custom_call.1} parent=1 // pred_check
      _
    $region3: #{tpu_custom_call.1} parent=1 // pred_check_branch
      %11 = sbr.rel (0) target = $region5
    $region4: #{tpu_custom_call.1} parent=1 // pred_region
      %s13 = ssub.s32 256, 256
      %14 = vsyncadd [#allocation6], %s13
      %s16 = sshll.u32 [#allocation5], 4
      %s17 = int_to_ptr.vmem [resolvable:$true] %s16
      %19 = dma.hbm_to_vmem [thread:$0]  %s0, 256, %s17, [#allocation6]
    $region5: #{tpu_custom_call.1} parent=1 // pred_fallthru
      _
    // Predicated region
    $region6: #{tpu_custom_call.1} parent=1 // pred_check
      _
    $region7: #{tpu_custom_call.1} parent=1 // pred_check_branch
      %21 = sbr.rel (0) target = $region9
    $region8: #{tpu_custom_call.1} parent=1 // pred_region
      %22 = dma.done [#allocation6], 256
    $region9: #{tpu_custom_call.1} parent=1 // pred_fallthru
      _
    %v23 = vld [vmem:[#allocation5] sm:$0xff]
    %v24 = vld [vmem:[#allocation5 + $0x8] sm:$0xff]
    %p25 = scmp.eq.s32.totalorder 0, 0
    // Predicated region
    $region10: #{tpu_custom_call.1} parent=1 // pred_check
      %p26 = pneg %p25
    $region11: #{tpu_custom_call.1} parent=1 // pred_check_branch
      %28 = sbr.rel (%p26) target = $region13
    $region12: #{tpu_custom_call.1} parent=1 // pred_region
      %v29 = vadd.f32 %v23, %v24
      %30 = vadd.xlane.f32.xlu0 %v29
      %v31 = vpop.xlane.xlu0 %30
      %v32 = vmul.f32 %v31, 0.00390625
      %vm33 = vcmask 7168
      %34 = vst.msk [vmem:[#allocation2] sm:$0xff] %vm33, %v32
      %35 = vst [vmem:[#allocation3] sm:$0xff] 0.0
      %36 = vst [vmem:[#allocation4] sm:$0xff] 0.0
    $region13: #{tpu_custom_call.1} parent=1 // pred_fallthru
      _
    %v37 = vld [vmem:[#allocation2] sm:$0xff]
    %39 = vset.pattern.permute.xlu0 0
    %40 = vperm.xlu0 %39, %v37
    %v41 = vpop.permute.xlu0 %40
    %v43 = vsub.f32 %v23, %v41
    %v44 = vsub.f32 %v24, %v41
    %v45 = vmul.f32 %v43, %v43
    %v46 = vadd.f32 %v43, %v44
    %v47 = vmul.f32 %v44, %v44
    %v48 = vadd.f32 %v45, %v47
    %v49 = vld [vmem:[#allocation3] sm:$0xff]
    %v50 = vadd.f32 %v49, %v46
    %51 = vst [vmem:[#allocation3] sm:$0xff] %v50
    %v52 = vld [vmem:[#allocation4] sm:$0xff]
    %v53 = vadd.f32 %v52, %v48
    %54 = vst [vmem:[#allocation4] sm:$0xff] %v53
    // Predicated region
    $region14: #{tpu_custom_call.1} parent=1 // pred_check
      %p55 = pneg %p25
    $region15: #{tpu_custom_call.1} parent=1 // pred_check_branch
      %57 = sbr.rel (%p55) target = $region17
    $region16: #{tpu_custom_call.1} parent=1 // pred_region
      %v58 = vld [vmem:[#allocation2] sm:$0xff]
      %vm59 = vcmask 7168
      %60 = vst.msk [vmem:[%s1] sm:$0xff] %vm59, %v58
      %v61 = vld [vmem:[#allocation3] sm:$0xff]
      %62 = vadd.xlane.f32.xlu0 %v61
      %v63 = vpop.xlane.xlu0 %62
      %64 = vst.msk [vmem:[%s2] sm:$0xff] %vm59, %v63
      %v65 = vld [vmem:[#allocation4] sm:$0xff]
      %66 = vadd.xlane.f32.xlu0 %v65
      %v67 = vpop.xlane.xlu0 %66
      %68 = vst.msk [vmem:[%s3] sm:$0xff] %vm59, %v67
    $region17: #{tpu_custom_call.1} parent=1 // pred_fallthru
      _
    // Predicated region
    $region18: #{tpu_custom_call.1} parent=1 // pred_check
      _
    $region19: #{tpu_custom_call.1} parent=1 // pred_check_branch
      %70 = sbr.rel (0) target = $region21
    $region20: #{tpu_custom_call.1} parent=1 // pred_region
      _
    $region21: #{tpu_custom_call.1} parent=1 // pred_fallthru
      _
    // Predicated region
    $region22: #{tpu_custom_call.1} parent=1 // pred_check
      _
    $region23: #{tpu_custom_call.1} parent=1 // pred_check_branch
      %72 = sbr.rel (0) target = $region25
    $region24: #{tpu_custom_call.1} parent=1 // pred_region
      _
    $region25: #{tpu_custom_call.1} parent=1 // pred_fallthru
      _
    // Predicated region
    $region26: #{tpu_custom_call.1} parent=1 // pred_check
      _
    $region27: #{tpu_custom_call.1} parent=1 // pred_check_branch
      %74 = sbr.rel (0) target = $region29
    $region28: #{tpu_custom_call.1} parent=1 // pred_region
      _
    $region29: #{tpu_custom_call.1} parent=1 // pred_fallthru
      _
    // Predicated region
    $region30: #{tpu_custom_call.1} parent=1 // pred_check
      _
    $region31: #{tpu_custom_call.1} parent=1 // pred_check_branch
      %76 = sbr.rel (0) target = $region33
    $region32: #{tpu_custom_call.1} parent=1 // pred_region
      _
    $region33: #{tpu_custom_call.1} parent=1 // pred_fallthru
      _
    // Predicated region
    $region34: #{tpu_custom_call.1} parent=1 // pred_check
      _
    $region35: #{tpu_custom_call.1} parent=1 // pred_check_branch
      %78 = sbr.rel (0) target = $region37
    $region36: #{tpu_custom_call.1} parent=1 // pred_region
      _
    $region37: #{tpu_custom_call.1} parent=1 // pred_fallthru
      _
    // Predicated region
    $region38: #{tpu_custom_call.1} parent=1 // pred_check
      _
    $region39: #{tpu_custom_call.1} parent=1 // pred_check_branch
      %80 = sbr.rel (0) target = $region41
    $region40: #{tpu_custom_call.1} parent=1 // pred_region
      _
    $region41: #{tpu_custom_call.1} parent=1 // pred_fallthru
      _
    %81 = vsyncpa [#allocation6], 1

</llo_original>
